<compile_context>
chip_gen: v5e
topology: v5e:2x2
jax: 0.10.0
libtpu: 0.0.40
codegen_flags: <defaults>
</compile_context>

<pallas_src>
import numpy as np
import jax
import jax.numpy as jnp
from jax import lax
from jax.experimental import pallas as pl
from jax.experimental.pallas import tpu as pltpu

C_OUT = 32
BN_EPS = 1e-5
LANE = 128

# (slice_start, slice_len, kernel, stride, pad); slice_len None -> "to the end"
# Mirrors: x[..., :16], x[..., 16:37], x[..., 37:67], x[..., 67:137], x[..., 137:]
_BRANCH_CFG = (
    (0,    16,   4,  2,  1),
    (16,   21,   7,  3,  2),
    (37,   30,  11,  5,  3),
    (67,   70,  20, 10,  5),
    (137, None, 40, 20, 10),
)

_VMEM = pl.BlockSpec(memory_space=pltpu.MemorySpace.VMEM)
_SMEM = pl.BlockSpec(memory_space=pltpu.MemorySpace.SMEM)


# ----------------------------------------------------------------------------
# Pallas kernel: one matmul + bias + PReLU for all 5 branches
# ----------------------------------------------------------------------------
def _fused_kernel(x_ref, w_ref, b_ref, alpha_ref, o_ref):
    alpha = alpha_ref[0]                                   # shared PReLU slope
    # Conv (all branches) as ONE GEMM against the block-Toeplitz weight.
    # Note: in-kernel MXU matmul uses default precision (bf16 passes) vs. the
    # reference's Precision.HIGHEST; effective contraction length per column is
    # <= 40 (zero rows elsewhere), so the error stays well below the tolerance.
    y = jnp.dot(x_ref[...], w_ref[...], preferred_element_type=jnp.float32)
    y = y + b_ref[...]
    o_ref[...] = jnp.where(y >= 0.0, y, alpha * y)


# ----------------------------------------------------------------------------
# Wrapper: single pallas_call, then per-branch slice + reshape (no transposes)
# ----------------------------------------------------------------------------
def subband_encode_forward(x, w_fused, b_fused, alpha, l_outs):
    """x: (B, 1, L) f32 -> tuple of 5 arrays (B, 32, L_out_g), PyTorch layout."""
    B, _, L = x.shape
    x2d = x.reshape(B, L)
    n_pad = w_fused.shape[1]

    out = pl.pallas_call(
        _fused_kernel,
        out_shape=jax.ShapeDtypeStruct((B, n_pad), jnp.float32),
        in_specs=[_VMEM, _VMEM, _VMEM, _SMEM],
        out_specs=_VMEM,
        cost_estimate=pl.CostEstimate(
            flops=2 * B * L * n_pad,
            transcendentals=0,
            bytes_accessed=4 * (B * L + L * n_pad + n_pad + B * n_pad)),
    )(x2d, w_fused, b_fused, jnp.asarray(alpha, jnp.float32).reshape(1))

    # Columns are ordered (branch, c, l): pure slice + reshape restores layout.
    outs, off = [], 0
    for L_out in l_outs:
        n = C_OUT * L_out
        outs.append(out[:, off:off + n].reshape(B, C_OUT, L_out))
        off += n
    return tuple(outs)


# ----------------------------------------------------------------------------
# Parameters (PyTorch-shaped, synthetic), BN folding, Toeplitz weight packing
# ----------------------------------------------------------------------------
def init_branch_params(key, K):
    ks = jax.random.split(key, 6)
    bound = 1.0 / float(np.sqrt(K))          # Conv1d default init bound (in_ch=1)
    return {
        "w":     jax.random.uniform(ks[0], (C_OUT, K), jnp.float32, -bound, bound),
        "b":     jax.random.uniform(ks[1], (C_OUT,), jnp.float32, -bound, bound),
        "gamma": 1.0 + 0.1 * jax.random.normal(ks[2], (C_OUT,), jnp.float32),
        "beta":  0.1 * jax.random.normal(ks[3], (C_OUT,), jnp.float32),
        "rmean": 0.1 * jax.random.normal(ks[4], (C_OUT,), jnp.float32),
        "rvar":  1.0 + 0.2 * jax.random.uniform(ks[5], (C_OUT,), jnp.float32),
    }


def fold_bn_into_conv(p):
    # Inference-mode BatchNorm1d folded into the conv weight/bias.
    # TODO(synk): training-mode BN (batch statistics + running-stat update) is not modeled.
    scale = p["gamma"] / jnp.sqrt(p["rvar"] + BN_EPS)
    w_eff = (p["w"] * scale[:, None]).T                    # (K, C_OUT)
    b_eff = (p["b"] - p["rmean"]) * scale + p["beta"]      # (C_OUT,)
    return w_eff, b_eff


def build_fused_params(folded_params, L):
    """Fold the conv unfold into a zero-padded block-Toeplitz weight.

    Returns:
      W:    (L, N_pad) f32, N_pad a multiple of 128 (lane-dense output).
      bias: (1, N_pad) f32.
      l_outs: per-branch output lengths.
    Column ordering is (branch, c, l) so output reshape is layout-free.
    """
    w_cols, b_cols, l_outs = [], [], []
    for (start, length, K, s, p), (w_eff, b_eff) in zip(_BRANCH_CFG, folded_params):
        length = (L - start) if length is None else length
        L_out = (length + 2 * p - K) // s + 1
        w = np.asarray(w_eff, dtype=np.float32)            # (K, C_OUT)
        b = np.asarray(b_eff, dtype=np.float32).reshape(C_OUT)
        Wb = np.zeros((L, C_OUT * L_out), dtype=np.float32)
        for l in range(L_out):
            for k in range(K):
                pos = l * s - p + k                        # position in the sub-band
                if 0 <= pos < length:                      # conv zero-pad -> zero rows
                    Wb[start + pos, l::L_out] = w[k, :]    # col = c*L_out + l
        w_cols.append(Wb)
        b_cols.append(np.repeat(b, L_out))                 # bias[c*L_out + l] = b[c]
        l_outs.append(L_out)

    W = np.concatenate(w_cols, axis=1)                     # (L, 1088)
    bias = np.concatenate(b_cols)                          # (1088,)
    n_used = W.shape[1]
    n_pad = ((n_used + LANE - 1) // LANE) * LANE           # 1088 -> 1152 (9*128)
    W = np.pad(W, ((0, 0), (0, n_pad - n_used)))
    bias = np.pad(bias, (0, n_pad - n_used))
    return jnp.asarray(W), jnp.asarray(bias)[None, :], tuple(l_outs)


# ----------------------------------------------------------------------------
# Pure-JAX reference (independent code path) for a correctness check
# ----------------------------------------------------------------------------
def subband_encode_reference(x, raw_params, alpha):
    outs = []
    L = x.shape[-1]
    for (start, length, K, s, p), rp in zip(_BRANCH_CFG, raw_params):
        length = (L - start) if length is None else length
        xs = x[:, :, start:start + length]
        y = lax.conv_general_dilated(
            xs, rp["w"][:, None, :], (s,), [(p, p)],
            dimension_numbers=("NCH", "OIH", "NCH"),
            precision=lax.Precision.HIGHEST)
        y = y + rp["b"][None, :, None]
        y = (y - rp["rmean"][None, :, None]) / jnp.sqrt(rp["rvar"] + BN_EPS)[None, :, None]
        y = y * rp["gamma"][None, :, None] + rp["beta"][None, :, None]
        outs.append(jnp.where(y >= 0.0, y, alpha * y))
    return tuple(outs)


if __name__ == "__main__":
    # x: (batch=2, in_ch=1, L=257) -> sub-bands of length 16 / 21 / 30 / 70 / 120
    B, L = 2, 257
    key = jax.random.PRNGKey(0)
    kx, kp = jax.random.split(key)
    x = jax.random.normal(kx, (B, 1, L), jnp.float32)

    bkeys = jax.random.split(kp, len(_BRANCH_CFG))
    raw_params = [init_branch_params(bkeys[g], _BRANCH_CFG[g][2])
                  for g in range(len(_BRANCH_CFG))]
    folded_params = [fold_bn_into_conv(rp) for rp in raw_params]
    alpha = jnp.float32(0.25)            # nn.PReLU() default single shared slope

    w_fused, b_fused, l_outs = build_fused_params(folded_params, L)

    outs = subband_encode_forward(x, w_fused, b_fused, alpha, l_outs)
    outs = tuple(jax.block_until_ready(o) for o in outs)

    refs = subband_encode_reference(x, raw_params, alpha)
    expected_lout = [8, 7, 6, 7, 6]
    for g, (yk, yr) in enumerate(zip(outs, refs)):
        assert yk.shape == (B, C_OUT, expected_lout[g]), (g, yk.shape)
        np.testing.assert_allclose(np.asarray(yk), np.asarray(yr),
                                   rtol=2e-4, atol=2e-4)

    print("KERNEL_OK")
</pallas_src>

<mosaic_0001>
module attributes {stable_mosaic.version = 11 : i64} {
  func.func @_fused_kernel(%arg0: memref<2x257xf32, #tpu.memory_space<vmem>>, %arg1: memref<257x1152xf32, #tpu.memory_space<vmem>>, %arg2: memref<1x1152xf32, #tpu.memory_space<vmem>>, %arg3: memref<1xf32, #tpu.memory_space<smem>>, %arg4: memref<2x1152xf32, #tpu.memory_space<vmem>>) attributes {dimension_semantics = [], scalar_prefetch = 0 : i64, scratch_operands = 0 : i64, tpu.core_type = #tpu.core_type<tc>} {
    %c0 = arith.constant 0 : index
    %0 = memref.load %arg3[%c0] : memref<1xf32, #tpu.memory_space<smem>>
    %c0_0 = arith.constant 0 : index
    %c0_1 = arith.constant 0 : index
    %1 = vector.load %arg0[%c0_0, %c0_1] : memref<2x257xf32, #tpu.memory_space<vmem>>, vector<2x257xf32>
    %c0_2 = arith.constant 0 : index
    %c0_3 = arith.constant 0 : index
    %2 = vector.load %arg1[%c0_2, %c0_3] : memref<257x1152xf32, #tpu.memory_space<vmem>>, vector<257x1152xf32>
    %cst = arith.constant dense<0.000000e+00> : vector<2x1152xf32>
    %3 = tpu.matmul %1, %2, %cst {dimension_numbers = #tpu.dot_dimension_numbers<[1], [0], [0], [1], [0, 0, 1, 1], [], []>} : vector<2x257xf32>, vector<257x1152xf32>, vector<2x1152xf32> -> vector<2x1152xf32>
    %c0_4 = arith.constant 0 : index
    %c0_5 = arith.constant 0 : index
    %4 = vector.load %arg2[%c0_4, %c0_5] : memref<1x1152xf32, #tpu.memory_space<vmem>>, vector<1x1152xf32>
    %5 = vector.broadcast %4 : vector<1x1152xf32> to vector<2x1152xf32>
    %6 = arith.addf %3, %5 : vector<2x1152xf32>
    %cst_6 = arith.constant 0.000000e+00 : f32
    %7 = vector.broadcast %cst_6 : f32 to vector<2x1152xf32>
    %8 = arith.cmpf oge, %6, %7 : vector<2x1152xf32>
    %9 = vector.broadcast %0 : f32 to vector<2x1152xf32>
    %10 = arith.mulf %9, %6 : vector<2x1152xf32>
    %11 = arith.select %8, %6, %10 : vector<2x1152xi1>, vector<2x1152xf32>
    %c0_7 = arith.constant 0 : index
    %c0_8 = arith.constant 0 : index
    %12 = vector.load %arg4[%c0_7, %c0_8] : memref<2x1152xf32, #tpu.memory_space<vmem>>, vector<2x1152xf32>
    tpu.vector_store %arg4[%c0_7, %c0_8], %11 {strides = array<i32>} : memref<2x1152xf32, #tpu.memory_space<vmem>>, vector<2x1152xf32>,
    return
  }
}

</mosaic_0001>

<llo_original>
// kernel: tpu_custom_call.1
$region0: #{tpu_custom_call.1}
  #allocation0 [shape = 'u32[]', space=smem, size = 0x4, offset = 0x4, fixed_abs, tag = 'smem constant byte address 0x4 - core index']
  #allocation1 [shape = 'u32[72,128]{1,0:T(1,128)}', space=vmem, size = 0x9000, scoped, tag = 'internal scratch']
  #allocation2 [shape = 'f32[1]{0:T(128)S(6)}', space=smem, size = 0x200, scoped, tag = 'scoped memory for tpu_custom_call.1']
  %s0 = inlined_call_operand.hbm [shape: f32[2,257], index: 0, kind: input, shape index: {}]
  %s1 = inlined_call_operand.hbm [shape: f32[257,1152], index: 1, kind: input, shape index: {}]
  %s2 = inlined_call_operand.hbm [shape: f32[1,1152], index: 2, kind: input, shape index: {}]
  %s3 = inlined_call_operand.<no memory space> [shape: f32[1], index: 3, kind: input, shape index: {}]
  %s4 = inlined_call_operand.hbm [shape: f32[2,1152], index: 4, kind: output, shape index: {}]
  %s5 = sld [smem:[#allocation0]]
  $region38: #{tpu_custom_call.1} parent=0
    _
  %s7 = ssub.s32 1, %s5
  %s8 = scalar_select 0, %s7, %s5
  %9 = sst [smem:[#allocation2]] %s3
  $region1: #{tpu_custom_call.1} parent=0
    #allocation3 [shape = 'u8[3072]{0}', space=vmem, size = 0xc00, scoped, tag = 'input window, operand 0, single buffered']
    #allocation4 [shape = 's32[1]{0}', space=sflag, size = 0x4, scoped, tag = 'scoped memory for tpu_custom_call.1']
    #allocation5 [shape = 's32[1]{0}', space=sflag, size = 0x4, scoped, tag = 'scoped memory for tpu_custom_call.1']
    #allocation6 [shape = 'u8[1216512]{0}', space=vmem, size = 0x129000, scoped, tag = 'input window, operand 1, single buffered']
    #allocation7 [shape = 's32[1]{0}', space=sflag, size = 0x4, scoped, tag = 'scoped memory for tpu_custom_call.1']
    #allocation8 [shape = 'u8[4608]{0}', space=vmem, size = 0x1400, scoped, tag = 'input window, operand 2, single buffered']
    #allocation9 [shape = 'u8[9216]{0}', space=vmem, size = 0x2400, scoped, tag = 'output window, operand 0, single buffered']
    %10 = vsyncpa [#allocation4], 0
    %11 = vsyncpa [#allocation7], 0
    %12 = vsyncpa [#allocation5], 0
    // Predicated region
    $region2: #{tpu_custom_call.1} parent=1 // pred_check
      _
    $region3: #{tpu_custom_call.1} parent=1 // pred_check_branch
      %14 = sbr.rel (0) target = $region5
    $region4: #{tpu_custom_call.1} parent=1 // pred_region
      %16 = vsyncadd [#allocation4], 0
      %s18 = sshll.u32 %s0, 4
      %s19 = int_to_ptr.hbm [resolvable:$true] %s18
      %s20 = sshll.u32 [#allocation3], 4
      %s21 = int_to_ptr.vmem [resolvable:$true] %s20
      %23 = dma.hbm_to_vmem [thread:$0]  %s19, 96, %s21, [#allocation4]
    $region5: #{tpu_custom_call.1} parent=1 // pred_fallthru
      _
    // Predicated region
    $region6: #{tpu_custom_call.1} parent=1 // pred_check
      _
    $region7: #{tpu_custom_call.1} parent=1 // pred_check_branch
      %25 = sbr.rel (0) target = $region9
    $region8: #{tpu_custom_call.1} parent=1 // pred_region
      %27 = vsyncadd [#allocation7], 0
      %s28 = sshll.u32 %s1, 4
      %s29 = int_to_ptr.hbm [resolvable:$true] %s28
      %s30 = sshll.u32 [#allocation6], 4
      %s31 = int_to_ptr.vmem [resolvable:$true] %s30
      %36 = dma.hbm_to_vmem [thread:$0]  %s29, 38016, %s31, [#allocation7], 1152, 1152, 72
    $region9: #{tpu_custom_call.1} parent=1 // pred_fallthru
      _
    // Predicated region
    $region10: #{tpu_custom_call.1} parent=1 // pred_check
      _
    $region11: #{tpu_custom_call.1} parent=1 // pred_check_branch
      %38 = sbr.rel (0) target = $region13
    $region12: #{tpu_custom_call.1} parent=1 // pred_region
      %40 = vsyncadd [#allocation7], 0
      %s42 = sshll.u32 %s2, 4
      %s43 = int_to_ptr.hbm [resolvable:$true] %s42
      %s44 = sshll.u32 [#allocation8], 4
      %s45 = int_to_ptr.vmem [resolvable:$true] %s44
      %47 = dma.hbm_to_vmem [thread:$0]  %s43, 144, %s45, [#allocation7]
    $region13: #{tpu_custom_call.1} parent=1 // pred_fallthru
      _
    // Predicated region
    $region14: #{tpu_custom_call.1} parent=1 // pred_check
      _
    $region15: #{tpu_custom_call.1} parent=1 // pred_check_branch
      %49 = sbr.rel (0) target = $region17
    $region16: #{tpu_custom_call.1} parent=1 // pred_region
      _
    $region17: #{tpu_custom_call.1} parent=1 // pred_fallthru
      _
    // Predicated region
    $region18: #{tpu_custom_call.1} parent=1 // pred_check
      _
    $region19: #{tpu_custom_call.1} parent=1 // pred_check_branch
      %51 = sbr.rel (0) target = $region21
    $region20: #{tpu_custom_call.1} parent=1 // pred_region
      %53 = dma.done [#allocation4], 96
    $region21: #{tpu_custom_call.1} parent=1 // pred_fallthru
      _
    // Predicated region
    $region22: #{tpu_custom_call.1} parent=1 // pred_check
      _
    $region23: #{tpu_custom_call.1} parent=1 // pred_check_branch
      %55 = sbr.rel (0) target = $region25
    $region24: #{tpu_custom_call.1} parent=1 // pred_region
      %57 = dma.done [#allocation7], 38016
    $region25: #{tpu_custom_call.1} parent=1 // pred_fallthru
      _
    // Predicated region
    $region26: #{tpu_custom_call.1} parent=1 // pred_check
      _
    $region27: #{tpu_custom_call.1} parent=1 // pred_check_branch
      %59 = sbr.rel (0) target = $region29
    $region28: #{tpu_custom_call.1} parent=1 // pred_region
      %61 = dma.done [#allocation7], 144
    $region29: #{tpu_custom_call.1} parent=1 // pred_fallthru
      _
    %s62 = sld [smem:[#allocation2]]
    %v63 = vld [vmem:[#allocation3] sm:$0x3f]
    %v64 = vld [vmem:[#allocation6] sm:$0xff]
    %v65 = vld [vmem:[#allocation6 + $0x8] sm:$0xff]
    %v66 = vld [vmem:[#allocation6 + $0x10] sm:$0xff]
    %v67 = vld [vmem:[#allocation6 + $0x18] sm:$0xff]
    %v68 = vld [vmem:[#allocation6 + $0x20] sm:$0xff]
    %v69 = vld [vmem:[#allocation6 + $0x28] sm:$0xff]
    %v70 = vld [vmem:[#allocation6 + $0x30] sm:$0xff]
    %v71 = vld [vmem:[#allocation6 + $0x38] sm:$0xff]
    %v72 = vld [vmem:[#allocation6 + $0x40] sm:$0xff]
    %v73 = vld [vmem:[#allocation6 + $0x48] sm:$0xff]
    %v74 = vld [vmem:[#allocation6 + $0x50] sm:$0xff]
    %v75 = vld [vmem:[#allocation6 + $0x58] sm:$0xff]
    %v76 = vld [vmem:[#allocation6 + $0x60] sm:$0xff]
    %v77 = vld [vmem:[#allocation6 + $0x68] sm:$0xff]
    %v78 = vld [vmem:[#allocation6 + $0x70] sm:$0xff]
    %v79 = vld [vmem:[#allocation6 + $0x78] sm:$0xff]
    %v80 = vld [vmem:[#allocation6 + $0x80] sm:$0xff]
    %v81 = vld [vmem:[#allocation6 + $0x88] sm:$0xff]
    %v82 = vld [vmem:[#allocation6 + $0x90] sm:$0xff]
    %v83 = vld [vmem:[#allocation6 + $0x98] sm:$0xff]
    %v84 = vld [vmem:[#allocation6 + $0xa0] sm:$0xff]
    %v85 = vld [vmem:[#allocation6 + $0xa8] sm:$0xff]
    %v86 = vld [vmem:[#allocation6 + $0xb0] sm:$0xff]
    %v87 = vld [vmem:[#allocation6 + $0xb8] sm:$0xff]
    %v88 = vld [vmem:[#allocation6 + $0xc0] sm:$0xff]
    %v89 = vld [vmem:[#allocation6 + $0xc8] sm:$0xff]
    %v90 = vld [vmem:[#allocation6 + $0xd0] sm:$0xff]
    %v91 = vld [vmem:[#allocation6 + $0xd8] sm:$0xff]
    %v92 = vld [vmem:[#allocation6 + $0xe0] sm:$0xff]
    %v93 = vld [vmem:[#allocation6 + $0xe8] sm:$0xff]
    %v94 = vld [vmem:[#allocation6 + $0xf0] sm:$0xff]
    %v95 = vld [vmem:[#allocation6 + $0xf8] sm:$0xff]
    %v96 = vld [vmem:[#allocation6 + $0x100] sm:$0xff]
    %v97 = vld [vmem:[#allocation6 + $0x108] sm:$0xff]
    %v98 = vld [vmem:[#allocation6 + $0x110] sm:$0xff]
    %v99 = vld [vmem:[#allocation6 + $0x118] sm:$0xff]
    %v100 = vld [vmem:[#allocation6 + $0x120] sm:$0xff]
    %v101 = vld [vmem:[#allocation6 + $0x128] sm:$0xff]
    %v102 = vld [vmem:[#allocation6 + $0x130] sm:$0xff]
    %v103 = vld [vmem:[#allocation6 + $0x138] sm:$0xff]
    %v104 = vld [vmem:[#allocation6 + $0x140] sm:$0xff]
    %v105 = vld [vmem:[#allocation6 + $0x148] sm:$0xff]
    %v106 = vld [vmem:[#allocation6 + $0x150] sm:$0xff]
    %v107 = vld [vmem:[#allocation6 + $0x158] sm:$0xff]
    %v108 = vld [vmem:[#allocation6 + $0x160] sm:$0xff]
    %v109 = vld [vmem:[#allocation6 + $0x168] sm:$0xff]
    %v110 = vld [vmem:[#allocation6 + $0x170] sm:$0xff]
    %v111 = vld [vmem:[#allocation6 + $0x178] sm:$0xff]
    %v112 = vld [vmem:[#allocation6 + $0x180] sm:$0xff]
    %v113 = vld [vmem:[#allocation6 + $0x188] sm:$0xff]
    %v114 = vld [vmem:[#allocation6 + $0x190] sm:$0xff]
    %v115 = vld [vmem:[#allocation6 + $0x198] sm:$0xff]
    %v116 = vld [vmem:[#allocation6 + $0x1a0] sm:$0xff]
    %v117 = vld [vmem:[#allocation6 + $0x1a8] sm:$0xff]
    %v118 = vld [vmem:[#allocation6 + $0x1b0] sm:$0xff]
    %v119 = vld [vmem:[#allocation6 + $0x1b8] sm:$0xff]
    %v120 = vld [vmem:[#allocation6 + $0x1c0] sm:$0xff]
    %v121 = vld [vmem:[#allocation6 + $0x1c8] sm:$0xff]
    %v122 = vld [vmem:[#allocation6 + $0x1d0] sm:$0xff]
    %v123 = vld [vmem:[#allocation6 + $0x1d8] sm:$0xff]
    %v124 = vld [vmem:[#allocation6 + $0x1e0] sm:$0xff]
    %v125 = vld [vmem:[#allocation6 + $0x1e8] sm:$0xff]
    %v126 = vld [vmem:[#allocation6 + $0x1f0] sm:$0xff]
    %v127 = vld [vmem:[#allocation6 + $0x1f8] sm:$0xff]
    %v128 = vld [vmem:[#allocation6 + $0x200] sm:$0xff]
    %v129 = vld [vmem:[#allocation6 + $0x208] sm:$0xff]
    %v130 = vld [vmem:[#allocation6 + $0x210] sm:$0xff]
    %v131 = vld [vmem:[#allocation6 + $0x218] sm:$0xff]
    %v132 = vld [vmem:[#allocation6 + $0x220] sm:$0xff]
    %v133 = vld [vmem:[#allocation6 + $0x228] sm:$0xff]
    %v134 = vld [vmem:[#allocation6 + $0x230] sm:$0xff]
    %v135 = vld [vmem:[#allocation6 + $0x238] sm:$0xff]
    %v136 = vld [vmem:[#allocation6 + $0x240] sm:$0xff]
    %v137 = vld [vmem:[#allocation6 + $0x248] sm:$0xff]
    %v138 = vld [vmem:[#allocation6 + $0x250] sm:$0xff]
    %v139 = vld [vmem:[#allocation6 + $0x258] sm:$0xff]
    %v140 = vld [vmem:[#allocation6 + $0x260] sm:$0xff]
    %v141 = vld [vmem:[#allocation6 + $0x268] sm:$0xff]
    %v142 = vld [vmem:[#allocation6 + $0x270] sm:$0xff]
    %v143 = vld [vmem:[#allocation6 + $0x278] sm:$0xff]
    %v144 = vld [vmem:[#allocation6 + $0x280] sm:$0xff]
    %v145 = vld [vmem:[#allocation6 + $0x288] sm:$0xff]
    %v146 = vld [vmem:[#allocation6 + $0x290] sm:$0xff]
    %v147 = vld [vmem:[#allocation6 + $0x298] sm:$0xff]
    %v148 = vld [vmem:[#allocation6 + $0x2a0] sm:$0xff]
    %v149 = vld [vmem:[#allocation6 + $0x2a8] sm:$0xff]
    %v150 = vld [vmem:[#allocation6 + $0x2b0] sm:$0xff]
    %v151 = vld [vmem:[#allocation6 + $0x2b8] sm:$0xff]
    %v152 = vld [vmem:[#allocation6 + $0x2c0] sm:$0xff]
    %v153 = vld [vmem:[#allocation6 + $0x2c8] sm:$0xff]
    %v154 = vld [vmem:[#allocation6 + $0x2d0] sm:$0xff]
    %v155 = vld [vmem:[#allocation6 + $0x2d8] sm:$0xff]
    %v156 = vld [vmem:[#allocation6 + $0x2e0] sm:$0xff]
    %v157 = vld [vmem:[#allocation6 + $0x2e8] sm:$0xff]
    %v158 = vld [vmem:[#allocation6 + $0x2f0] sm:$0xff]
    %v159 = vld [vmem:[#allocation6 + $0x2f8] sm:$0xff]
    %v160 = vld [vmem:[#allocation6 + $0x300] sm:$0xff]
    %v161 = vld [vmem:[#allocation6 + $0x308] sm:$0xff]
    %v162 = vld [vmem:[#allocation6 + $0x310] sm:$0xff]
    %v163 = vld [vmem:[#allocation6 + $0x318] sm:$0xff]
    %v164 = vld [vmem:[#allocation6 + $0x320] sm:$0xff]
    %v165 = vld [vmem:[#allocation6 + $0x328] sm:$0xff]
    %v166 = vld [vmem:[#allocation6 + $0x330] sm:$0xff]
    %v167 = vld [vmem:[#allocation6 + $0x338] sm:$0xff]
    %v168 = vld [vmem:[#allocation6 + $0x340] sm:$0xff]
    %v169 = vld [vmem:[#allocation6 + $0x348] sm:$0xff]
    %v170 = vld [vmem:[#allocation6 + $0x350] sm:$0xff]
    %v171 = vld [vmem:[#allocation6 + $0x358] sm:$0xff]
    %v172 = vld [vmem:[#allocation6 + $0x360] sm:$0xff]
    %v173 = vld [vmem:[#allocation6 + $0x368] sm:$0xff]
    %v174 = vld [vmem:[#allocation6 + $0x370] sm:$0xff]
    %v175 = vld [vmem:[#allocation6 + $0x378] sm:$0xff]
    %v176 = vld [vmem:[#allocation6 + $0x380] sm:$0xff]
    %v177 = vld [vmem:[#allocation6 + $0x388] sm:$0xff]
    %v178 = vld [vmem:[#allocation6 + $0x390] sm:$0xff]
    %v179 = vld [vmem:[#allocation6 + $0x398] sm:$0xff]
    %v180 = vld [vmem:[#allocation6 + $0x3a0] sm:$0xff]
    %v181 = vld [vmem:[#allocation6 + $0x3a8] sm:$0xff]
    %v182 = vld [vmem:[#allocation6 + $0x3b0] sm:$0xff]
    %v183 = vld [vmem:[#allocation6 + $0x3b8] sm:$0xff]
    %v184 = vld [vmem:[#allocation6 + $0x3c0] sm:$0xff]
    %v185 = vld [vmem:[#allocation6 + $0x3c8] sm:$0xff]
    %v186 = vld [vmem:[#allocation6 + $0x3d0] sm:$0xff]
    %v187 = vld [vmem:[#allocation6 + $0x3d8] sm:$0xff]
    %v188 = vld [vmem:[#allocation6 + $0x3e0] sm:$0xff]
    %v189 = vld [vmem:[#allocation6 + $0x3e8] sm:$0xff]
    %v190 = vld [vmem:[#allocation6 + $0x3f0] sm:$0xff]
    %v191 = vld [vmem:[#allocation6 + $0x3f8] sm:$0xff]
    %v192 = vld [vmem:[#allocation6 + $0x400] sm:$0xff]
    %v193 = vld [vmem:[#allocation6 + $0x408] sm:$0xff]
    %v194 = vld [vmem:[#allocation6 + $0x410] sm:$0xff]
    %v195 = vld [vmem:[#allocation6 + $0x418] sm:$0xff]
    %v196 = vld [vmem:[#allocation6 + $0x420] sm:$0xff]
    %v197 = vld [vmem:[#allocation6 + $0x428] sm:$0xff]
    %v198 = vld [vmem:[#allocation6 + $0x430] sm:$0xff]
    %v199 = vld [vmem:[#allocation6 + $0x438] sm:$0xff]
    %v200 = vld [vmem:[#allocation6 + $0x440] sm:$0xff]
    %v201 = vld [vmem:[#allocation6 + $0x448] sm:$0xff]
    %v202 = vld [vmem:[#allocation6 + $0x450] sm:$0xff]
    %v203 = vld [vmem:[#allocation6 + $0x458] sm:$0xff]
    %v204 = vld [vmem:[#allocation6 + $0x460] sm:$0xff]
    %v205 = vld [vmem:[#allocation6 + $0x468] sm:$0xff]
    %v206 = vld [vmem:[#allocation6 + $0x470] sm:$0xff]
    %v207 = vld [vmem:[#allocation6 + $0x478] sm:$0xff]
    %v208 = vld [vmem:[#allocation6 + $0x480] sm:$0xff]
    %v209 = vld [vmem:[#allocation6 + $0x488] sm:$0xff]
    %v210 = vld [vmem:[#allocation6 + $0x490] sm:$0xff]
    %v211 = vld [vmem:[#allocation6 + $0x498] sm:$0xff]
    %v212 = vld [vmem:[#allocation6 + $0x4a0] sm:$0xff]
    %v213 = vld [vmem:[#allocation6 + $0x4a8] sm:$0xff]
    %v214 = vld [vmem:[#allocation6 + $0x4b0] sm:$0xff]
    %v215 = vld [vmem:[#allocation6 + $0x4b8] sm:$0xff]
    %v216 = vld [vmem:[#allocation6 + $0x4c0] sm:$0xff]
    %v217 = vld [vmem:[#allocation6 + $0x4c8] sm:$0xff]
    %v218 = vld [vmem:[#allocation6 + $0x4d0] sm:$0xff]
    %v219 = vld [vmem:[#allocation6 + $0x4d8] sm:$0xff]
    %v220 = vld [vmem:[#allocation6 + $0x4e0] sm:$0xff]
    %v221 = vld [vmem:[#allocation6 + $0x4e8] sm:$0xff]
    %v222 = vld [vmem:[#allocation6 + $0x4f0] sm:$0xff]
    %v223 = vld [vmem:[#allocation6 + $0x4f8] sm:$0xff]
    %v224 = vld [vmem:[#allocation6 + $0x500] sm:$0xff]
    %v225 = vld [vmem:[#allocation6 + $0x508] sm:$0xff]
    %v226 = vld [vmem:[#allocation6 + $0x510] sm:$0xff]
    %v227 = vld [vmem:[#allocation6 + $0x518] sm:$0xff]
    %v228 = vld [vmem:[#allocation6 + $0x520] sm:$0xff]
    %v229 = vld [vmem:[#allocation6 + $0x528] sm:$0xff]
    %v230 = vld [vmem:[#allocation6 + $0x530] sm:$0xff]
    %v231 = vld [vmem:[#allocation6 + $0x538] sm:$0xff]
    %v232 = vld [vmem:[#allocation6 + $0x540] sm:$0xff]
    %v233 = vld [vmem:[#allocation6 + $0x548] sm:$0xff]
    %v234 = vld [vmem:[#allocation6 + $0x550] sm:$0xff]
    %v235 = vld [vmem:[#allocation6 + $0x558] sm:$0xff]
    %v236 = vld [vmem:[#allocation6 + $0x560] sm:$0xff]
    %v237 = vld [vmem:[#allocation6 + $0x568] sm:$0xff]
    %v238 = vld [vmem:[#allocation6 + $0x570] sm:$0xff]
    %v239 = vld [vmem:[#allocation6 + $0x578] sm:$0xff]
    %v240 = vld [vmem:[#allocation6 + $0x580] sm:$0xff]
    %v241 = vld [vmem:[#allocation6 + $0x588] sm:$0xff]
    %v242 = vld [vmem:[#allocation6 + $0x590] sm:$0xff]
    %v243 = vld [vmem:[#allocation6 + $0x598] sm:$0xff]
    %v244 = vld [vmem:[#allocation6 + $0x5a0] sm:$0xff]
    %v245 = vld [vmem:[#allocation6 + $0x5a8] sm:$0xff]
    %v246 = vld [vmem:[#allocation6 + $0x5b0] sm:$0xff]
    %v247 = vld [vmem:[#allocation6 + $0x5b8] sm:$0xff]
    %v248 = vld [vmem:[#allocation6 + $0x5c0] sm:$0xff]
    %v249 = vld [vmem:[#allocation6 + $0x5c8] sm:$0xff]
    %v250 = vld [vmem:[#allocation6 + $0x5d0] sm:$0xff]
    %v251 = vld [vmem:[#allocation6 + $0x5d8] sm:$0xff]
    %v252 = vld [vmem:[#allocation6 + $0x5e0] sm:$0xff]
    %v253 = vld [vmem:[#allocation6 + $0x5e8] sm:$0xff]
    %v254 = vld [vmem:[#allocation6 + $0x5f0] sm:$0xff]
    %v255 = vld [vmem:[#allocation6 + $0x5f8] sm:$0xff]
    %v256 = vld [vmem:[#allocation6 + $0x600] sm:$0xff]
    %v257 = vld [vmem:[#allocation6 + $0x608] sm:$0xff]
    %v258 = vld [vmem:[#allocation6 + $0x610] sm:$0xff]
    %v259 = vld [vmem:[#allocation6 + $0x618] sm:$0xff]
    %v260 = vld [vmem:[#allocation6 + $0x620] sm:$0xff]
    %v261 = vld [vmem:[#allocation6 + $0x628] sm:$0xff]
    %v262 = vld [vmem:[#allocation6 + $0x630] sm:$0xff]
    %v263 = vld [vmem:[#allocation6 + $0x638] sm:$0xff]
    %v264 = vld [vmem:[#allocation6 + $0x640] sm:$0xff]
    %v265 = vld [vmem:[#allocation6 + $0x648] sm:$0xff]
    %v266 = vld [vmem:[#allocation6 + $0x650] sm:$0xff]
    %v267 = vld [vmem:[#allocation6 + $0x658] sm:$0xff]
    %v268 = vld [vmem:[#allocation6 + $0x660] sm:$0xff]
    %v269 = vld [vmem:[#allocation6 + $0x668] sm:$0xff]
    %v270 = vld [vmem:[#allocation6 + $0x670] sm:$0xff]
    %v271 = vld [vmem:[#allocation6 + $0x678] sm:$0xff]
    %v272 = vld [vmem:[#allocation6 + $0x680] sm:$0xff]
    %v273 = vld [vmem:[#allocation6 + $0x688] sm:$0xff]
    %v274 = vld [vmem:[#allocation6 + $0x690] sm:$0xff]
    %v275 = vld [vmem:[#allocation6 + $0x698] sm:$0xff]
    %v276 = vld [vmem:[#allocation6 + $0x6a0] sm:$0xff]
    %v277 = vld [vmem:[#allocation6 + $0x6a8] sm:$0xff]
    %v278 = vld [vmem:[#allocation6 + $0x6b0] sm:$0xff]
    %v279 = vld [vmem:[#allocation6 + $0x6b8] sm:$0xff]
    %v280 = vld [vmem:[#allocation6 + $0x6c0] sm:$0xff]
    %v281 = vld [vmem:[#allocation6 + $0x6c8] sm:$0xff]
    %v282 = vld [vmem:[#allocation6 + $0x6d0] sm:$0xff]
    %v283 = vld [vmem:[#allocation6 + $0x6d8] sm:$0xff]
    %v284 = vld [vmem:[#allocation6 + $0x6e0] sm:$0xff]
    %v285 = vld [vmem:[#allocation6 + $0x6e8] sm:$0xff]
    %v286 = vld [vmem:[#allocation6 + $0x6f0] sm:$0xff]
    %v287 = vld [vmem:[#allocation6 + $0x6f8] sm:$0xff]
    %v288 = vld [vmem:[#allocation6 + $0x700] sm:$0xff]
    %v289 = vld [vmem:[#allocation6 + $0x708] sm:$0xff]
    %v290 = vld [vmem:[#allocation6 + $0x710] sm:$0xff]
    %v291 = vld [vmem:[#allocation6 + $0x718] sm:$0xff]
    %v292 = vld [vmem:[#allocation6 + $0x720] sm:$0xff]
    %v293 = vld [vmem:[#allocation6 + $0x728] sm:$0xff]
    %v294 = vld [vmem:[#allocation6 + $0x730] sm:$0xff]
    %v295 = vld [vmem:[#allocation6 + $0x738] sm:$0xff]
    %v296 = vld [vmem:[#allocation6 + $0x740] sm:$0xff]
    %v297 = vld [vmem:[#allocation6 + $0x748] sm:$0xff]
    %v298 = vld [vmem:[#allocation6 + $0x750] sm:$0xff]
    %v299 = vld [vmem:[#allocation6 + $0x758] sm:$0xff]
    %v300 = vld [vmem:[#allocation6 + $0x760] sm:$0xff]
    %v301 = vld [vmem:[#allocation6 + $0x768] sm:$0xff]
    %v302 = vld [vmem:[#allocation6 + $0x770] sm:$0xff]
    %v303 = vld [vmem:[#allocation6 + $0x778] sm:$0xff]
    %v304 = vld [vmem:[#allocation6 + $0x780] sm:$0xff]
    %v305 = vld [vmem:[#allocation6 + $0x788] sm:$0xff]
    %v306 = vld [vmem:[#allocation6 + $0x790] sm:$0xff]
    %v307 = vld [vmem:[#allocation6 + $0x798] sm:$0xff]
    %v308 = vld [vmem:[#allocation6 + $0x7a0] sm:$0xff]
    %v309 = vld [vmem:[#allocation6 + $0x7a8] sm:$0xff]
    %v310 = vld [vmem:[#allocation6 + $0x7b0] sm:$0xff]
    %v311 = vld [vmem:[#allocation6 + $0x7b8] sm:$0xff]
    %v312 = vld [vmem:[#allocation6 + $0x7c0] sm:$0xff]
    %v313 = vld [vmem:[#allocation6 + $0x7c8] sm:$0xff]
    %v314 = vld [vmem:[#allocation6 + $0x7d0] sm:$0xff]
    %v315 = vld [vmem:[#allocation6 + $0x7d8] sm:$0xff]
    %v316 = vld [vmem:[#allocation6 + $0x7e0] sm:$0xff]
    %v317 = vld [vmem:[#allocation6 + $0x7e8] sm:$0xff]
    %v318 = vld [vmem:[#allocation6 + $0x7f0] sm:$0xff]
    %v319 = vld [vmem:[#allocation6 + $0x7f8] sm:$0xff]
    %v320 = vld [vmem:[#allocation6 + $0x800] sm:$0xff]
    %v321 = vld [vmem:[#allocation6 + $0x808] sm:$0xff]
    %v322 = vld [vmem:[#allocation6 + $0x810] sm:$0xff]
    %v323 = vld [vmem:[#allocation6 + $0x818] sm:$0xff]
    %v324 = vld [vmem:[#allocation6 + $0x820] sm:$0xff]
    %v325 = vld [vmem:[#allocation6 + $0x828] sm:$0xff]
    %v326 = vld [vmem:[#allocation6 + $0x830] sm:$0xff]
    %v327 = vld [vmem:[#allocation6 + $0x838] sm:$0xff]
    %v328 = vld [vmem:[#allocation6 + $0x840] sm:$0xff]
    %v329 = vld [vmem:[#allocation6 + $0x848] sm:$0xff]
    %v330 = vld [vmem:[#allocation6 + $0x850] sm:$0xff]
    %v331 = vld [vmem:[#allocation6 + $0x858] sm:$0xff]
    %v332 = vld [vmem:[#allocation6 + $0x860] sm:$0xff]
    %v333 = vld [vmem:[#allocation6 + $0x868] sm:$0xff]
    %v334 = vld [vmem:[#allocation6 + $0x870] sm:$0xff]
    %v335 = vld [vmem:[#allocation6 + $0x878] sm:$0xff]
    %v336 = vld [vmem:[#allocation6 + $0x880] sm:$0xff]
    %v337 = vld [vmem:[#allocation6 + $0x888] sm:$0xff]
    %v338 = vld [vmem:[#allocation6 + $0x890] sm:$0xff]
    %v339 = vld [vmem:[#allocation6 + $0x898] sm:$0xff]
    %v340 = vld [vmem:[#allocation6 + $0x8a0] sm:$0xff]
    %v341 = vld [vmem:[#allocation6 + $0x8a8] sm:$0xff]
    %v342 = vld [vmem:[#allocation6 + $0x8b0] sm:$0xff]
    %v343 = vld [vmem:[#allocation6 + $0x8b8] sm:$0xff]
    %v344 = vld [vmem:[#allocation6 + $0x8c0] sm:$0xff]
    %v345 = vld [vmem:[#allocation6 + $0x8c8] sm:$0xff]
    %v346 = vld [vmem:[#allocation6 + $0x8d0] sm:$0xff]
    %v347 = vld [vmem:[#allocation6 + $0x8d8] sm:$0xff]
    %v348 = vld [vmem:[#allocation6 + $0x8e0] sm:$0xff]
    %v349 = vld [vmem:[#allocation6 + $0x8e8] sm:$0xff]
    %v350 = vld [vmem:[#allocation6 + $0x8f0] sm:$0xff]
    %v351 = vld [vmem:[#allocation6 + $0x8f8] sm:$0xff]
    %v352 = vld [vmem:[#allocation6 + $0x900] sm:$0x1]
    %v353 = vld [vmem:[#allocation6 + $0x908] sm:$0x1]
    %v354 = vld [vmem:[#allocation6 + $0x910] sm:$0x1]
    %v355 = vld [vmem:[#allocation6 + $0x918] sm:$0x1]
    %v356 = vld [vmem:[#allocation6 + $0x920] sm:$0x1]
    %v357 = vld [vmem:[#allocation6 + $0x928] sm:$0x1]
    %v358 = vld [vmem:[#allocation6 + $0x930] sm:$0x1]
    %v359 = vld [vmem:[#allocation6 + $0x938] sm:$0x1]
    %v360 = vld [vmem:[#allocation6 + $0x940] sm:$0x1]
    %v361 = vld [vmem:[#allocation8] sm:$0xff]
    %v362 = vld [vmem:[#allocation8 + $0x8] sm:$0x1]
    %v365 = vperm.slane %v361, 0
    %v366 = vperm.slane %v361, 1
    %v367 = vperm.slane %v361, 2
    %v368 = vperm.slane %v361, 3
    %v369 = vperm.slane %v361, 4
    %v370 = vperm.slane %v361, 5
    %v371 = vperm.slane %v361, 6
    %v372 = vperm.slane %v361, 7
    %v373 = vperm.slane %v362, 0
    %384 = vst [vmem:[#allocation1] ss:$4 sm:$0xff] %v63
    %v385 = vld.sshfl [vmem:[#allocation1] sm:$0xff pattern:$0x73625140]
    %v386 = vld.sshfl [vmem:[#allocation1 + $0x8] sm:$0xff pattern:$0x73625140]
    %v387 = vld.sshfl [vmem:[#allocation1 + $0x10] sm:$0xff pattern:$0x73625140]
    %vm390 = vcmask 7168
    %v391 = vsel %vm390, %v387, 0
    %vm393 = vcmask 1040384
    %v395 = vsel %vm393, %v352, 0
    %v398 = vsel %vm393, %v353, 0
    %v401 = vsel %vm393, %v354, 0
    %v404 = vsel %vm393, %v355, 0
    %v407 = vsel %vm393, %v356, 0
    %v410 = vsel %vm393, %v357, 0
    %v413 = vsel %vm393, %v358, 0
    %v416 = vsel %vm393, %v359, 0
    %v419 = vsel %vm393, %v360, 0
    %421 = vmatpush.msra.mxu0 %v199
    %422 = vmatpush.msra.mxu0 %v190
    %423 = vmatpush.msra.mxu0 %v181
    %424 = vmatpush.msra.mxu0 %v172
    %425 = vmatpush.msra.mxu0 %v163
    %426 = vmatpush.msra.mxu0 %v154
    %427 = vmatpush.msra.mxu0 %v145
    %428 = vmatpush.msra.mxu0 %v136
    %429 = vmatpush.msra.mxu0 %v127
    %430 = vmatpush.msra.mxu0 %v118
    %431 = vmatpush.msra.mxu0 %v109
    %432 = vmatpush.msra.mxu0 %v100
    %433 = vmatpush.msra.mxu0 %v91
    %434 = vmatpush.msra.mxu0 %v82
    %435 = vmatpush.msra.mxu0 %v73
    %436 = vmatpush.msra.mxu0 %v64
    %437 = vmatmul.f32.gmra.mxu0 %v385
    %v438 = vpop.f32.mrf.mxu0
    %v439 = vadd.f32 %v365, %v438
    %440 = vdwg.mxu0
    %441 = vmatpush.msra.mxu0 %v343
    %442 = vmatpush.msra.mxu0 %v334
    %443 = vmatpush.msra.mxu0 %v325
    %444 = vmatpush.msra.mxu0 %v316
    %445 = vmatpush.msra.mxu0 %v307
    %446 = vmatpush.msra.mxu0 %v298
    %447 = vmatpush.msra.mxu0 %v289
    %448 = vmatpush.msra.mxu0 %v280
    %449 = vmatpush.msra.mxu0 %v271
    %450 = vmatpush.msra.mxu0 %v262
    %451 = vmatpush.msra.mxu0 %v253
    %452 = vmatpush.msra.mxu0 %v244
    %453 = vmatpush.msra.mxu0 %v235
    %454 = vmatpush.msra.mxu0 %v226
    %455 = vmatpush.msra.mxu0 %v217
    %456 = vmatpush.msra.mxu0 %v208
    %457 = vmatmul.f32.gmra.mxu0 %v386
    %v458 = vpop.f32.mrf.mxu0
    %v459 = vadd.f32 %v439, %v458
    %460 = vdwg.mxu0
    %461 = vmatpush.msra.mxu0 0.0
    %462 = vmatpush.msra.mxu0 0.0
    %463 = vmatpush.msra.mxu0 0.0
    %464 = vmatpush.msra.mxu0 0.0
    %465 = vmatpush.msra.mxu0 0.0
    %466 = vmatpush.msra.mxu0 0.0
    %467 = vmatpush.msra.mxu0 0.0
    %468 = vmatpush.msra.mxu0 0.0
    %469 = vmatpush.msra.mxu0 0.0
    %470 = vmatpush.msra.mxu0 0.0
    %471 = vmatpush.msra.mxu0 0.0
    %472 = vmatpush.msra.mxu0 0.0
    %473 = vmatpush.msra.mxu0 0.0
    %474 = vmatpush.msra.mxu0 0.0
    %475 = vmatpush.msra.mxu0 0.0
    %476 = vmatpush.msra.mxu0 %v395
    %477 = vmatmul.f32.gmra.mxu0 %v391
    %v478 = vpop.f32.mrf.mxu0
    %v479 = vadd.f32 %v459, %v478
    %480 = vdwg.mxu0
    %481 = vmatpush.msra.mxu0 %v200
    %482 = vmatpush.msra.mxu0 %v191
    %483 = vmatpush.msra.mxu0 %v182
    %484 = vmatpush.msra.mxu0 %v173
    %485 = vmatpush.msra.mxu0 %v164
    %486 = vmatpush.msra.mxu0 %v155
    %487 = vmatpush.msra.mxu0 %v146
    %488 = vmatpush.msra.mxu0 %v137
    %489 = vmatpush.msra.mxu0 %v128
    %490 = vmatpush.msra.mxu0 %v119
    %491 = vmatpush.msra.mxu0 %v110
    %492 = vmatpush.msra.mxu0 %v101
    %493 = vmatpush.msra.mxu0 %v92
    %494 = vmatpush.msra.mxu0 %v83
    %495 = vmatpush.msra.mxu0 %v74
    %496 = vmatpush.msra.mxu0 %v65
    %497 = vmatmul.f32.gmra.mxu0 %v385
    %v498 = vpop.f32.mrf.mxu0
    %v499 = vadd.f32 %v366, %v498
    %500 = vdwg.mxu0
    %501 = vmatpush.msra.mxu0 %v344
    %502 = vmatpush.msra.mxu0 %v335
    %503 = vmatpush.msra.mxu0 %v326
    %504 = vmatpush.msra.mxu0 %v317
    %505 = vmatpush.msra.mxu0 %v308
    %506 = vmatpush.msra.mxu0 %v299
    %507 = vmatpush.msra.mxu0 %v290
    %508 = vmatpush.msra.mxu0 %v281
    %509 = vmatpush.msra.mxu0 %v272
    %510 = vmatpush.msra.mxu0 %v263
    %511 = vmatpush.msra.mxu0 %v254
    %512 = vmatpush.msra.mxu0 %v245
    %513 = vmatpush.msra.mxu0 %v236
    %514 = vmatpush.msra.mxu0 %v227
    %515 = vmatpush.msra.mxu0 %v218
    %516 = vmatpush.msra.mxu0 %v209
    %517 = vmatmul.f32.gmra.mxu0 %v386
    %v518 = vpop.f32.mrf.mxu0
    %v519 = vadd.f32 %v499, %v518
    %520 = vdwg.mxu0
    %521 = vmatpush.msra.mxu0 0.0
    %522 = vmatpush.msra.mxu0 0.0
    %523 = vmatpush.msra.mxu0 0.0
    %524 = vmatpush.msra.mxu0 0.0
    %525 = vmatpush.msra.mxu0 0.0
    %526 = vmatpush.msra.mxu0 0.0
    %527 = vmatpush.msra.mxu0 0.0
    %528 = vmatpush.msra.mxu0 0.0
    %529 = vmatpush.msra.mxu0 0.0
    %530 = vmatpush.msra.mxu0 0.0
    %531 = vmatpush.msra.mxu0 0.0
    %532 = vmatpush.msra.mxu0 0.0
    %533 = vmatpush.msra.mxu0 0.0
    %534 = vmatpush.msra.mxu0 0.0
    %535 = vmatpush.msra.mxu0 0.0
    %536 = vmatpush.msra.mxu0 %v398
    %537 = vmatmul.f32.gmra.mxu0 %v391
    %v538 = vpop.f32.mrf.mxu0
    %v539 = vadd.f32 %v519, %v538
    %540 = vdwg.mxu0
    %541 = vmatpush.msra.mxu0 %v201
    %542 = vmatpush.msra.mxu0 %v192
    %543 = vmatpush.msra.mxu0 %v183
    %544 = vmatpush.msra.mxu0 %v174
    %545 = vmatpush.msra.mxu0 %v165
    %546 = vmatpush.msra.mxu0 %v156
    %547 = vmatpush.msra.mxu0 %v147
    %548 = vmatpush.msra.mxu0 %v138
    %549 = vmatpush.msra.mxu0 %v129
    %550 = vmatpush.msra.mxu0 %v120
    %551 = vmatpush.msra.mxu0 %v111
    %552 = vmatpush.msra.mxu0 %v102
    %553 = vmatpush.msra.mxu0 %v93
    %554 = vmatpush.msra.mxu0 %v84
    %555 = vmatpush.msra.mxu0 %v75
    %556 = vmatpush.msra.mxu0 %v66
    %557 = vmatmul.f32.gmra.mxu0 %v385
    %v558 = vpop.f32.mrf.mxu0
    %v559 = vadd.f32 %v367, %v558
    %560 = vdwg.mxu0
    %561 = vmatpush.msra.mxu0 %v345
    %562 = vmatpush.msra.mxu0 %v336
    %563 = vmatpush.msra.mxu0 %v327
    %564 = vmatpush.msra.mxu0 %v318
    %565 = vmatpush.msra.mxu0 %v309
    %566 = vmatpush.msra.mxu0 %v300
    %567 = vmatpush.msra.mxu0 %v291
    %568 = vmatpush.msra.mxu0 %v282
    %569 = vmatpush.msra.mxu0 %v273
    %570 = vmatpush.msra.mxu0 %v264
    %571 = vmatpush.msra.mxu0 %v255
    %572 = vmatpush.msra.mxu0 %v246
    %573 = vmatpush.msra.mxu0 %v237
    %574 = vmatpush.msra.mxu0 %v228
    %575 = vmatpush.msra.mxu0 %v219
    %576 = vmatpush.msra.mxu0 %v210
    %577 = vmatmul.f32.gmra.mxu0 %v386
    %v578 = vpop.f32.mrf.mxu0
    %v579 = vadd.f32 %v559, %v578
    %580 = vdwg.mxu0
    %581 = vmatpush.msra.mxu0 0.0
    %582 = vmatpush.msra.mxu0 0.0
    %583 = vmatpush.msra.mxu0 0.0
    %584 = vmatpush.msra.mxu0 0.0
    %585 = vmatpush.msra.mxu0 0.0
    %586 = vmatpush.msra.mxu0 0.0
    %587 = vmatpush.msra.mxu0 0.0
    %588 = vmatpush.msra.mxu0 0.0
    %589 = vmatpush.msra.mxu0 0.0
    %590 = vmatpush.msra.mxu0 0.0
    %591 = vmatpush.msra.mxu0 0.0
    %592 = vmatpush.msra.mxu0 0.0
    %593 = vmatpush.msra.mxu0 0.0
    %594 = vmatpush.msra.mxu0 0.0
    %595 = vmatpush.msra.mxu0 0.0
    %596 = vmatpush.msra.mxu0 %v401
    %597 = vmatmul.f32.gmra.mxu0 %v391
    %v598 = vpop.f32.mrf.mxu0
    %v599 = vadd.f32 %v579, %v598
    %600 = vdwg.mxu0
    %601 = vmatpush.msra.mxu0 %v202
    %602 = vmatpush.msra.mxu0 %v193
    %603 = vmatpush.msra.mxu0 %v184
    %604 = vmatpush.msra.mxu0 %v175
    %605 = vmatpush.msra.mxu0 %v166
    %606 = vmatpush.msra.mxu0 %v157
    %607 = vmatpush.msra.mxu0 %v148
    %608 = vmatpush.msra.mxu0 %v139
    %609 = vmatpush.msra.mxu0 %v130
    %610 = vmatpush.msra.mxu0 %v121
    %611 = vmatpush.msra.mxu0 %v112
    %612 = vmatpush.msra.mxu0 %v103
    %613 = vmatpush.msra.mxu0 %v94
    %614 = vmatpush.msra.mxu0 %v85
    %615 = vmatpush.msra.mxu0 %v76
    %616 = vmatpush.msra.mxu0 %v67
    %617 = vmatmul.f32.gmra.mxu0 %v385
    %v618 = vpop.f32.mrf.mxu0
    %v619 = vadd.f32 %v368, %v618
    %620 = vdwg.mxu0
    %621 = vmatpush.msra.mxu0 %v346
    %622 = vmatpush.msra.mxu0 %v337
    %623 = vmatpush.msra.mxu0 %v328
    %624 = vmatpush.msra.mxu0 %v319
    %625 = vmatpush.msra.mxu0 %v310
    %626 = vmatpush.msra.mxu0 %v301
    %627 = vmatpush.msra.mxu0 %v292
    %628 = vmatpush.msra.mxu0 %v283
    %629 = vmatpush.msra.mxu0 %v274
    %630 = vmatpush.msra.mxu0 %v265
    %631 = vmatpush.msra.mxu0 %v256
    %632 = vmatpush.msra.mxu0 %v247
    %633 = vmatpush.msra.mxu0 %v238
    %634 = vmatpush.msra.mxu0 %v229
    %635 = vmatpush.msra.mxu0 %v220
    %636 = vmatpush.msra.mxu0 %v211
    %637 = vmatmul.f32.gmra.mxu0 %v386
    %v638 = vpop.f32.mrf.mxu0
    %v639 = vadd.f32 %v619, %v638
    %640 = vdwg.mxu0
    %641 = vmatpush.msra.mxu0 0.0
    %642 = vmatpush.msra.mxu0 0.0
    %643 = vmatpush.msra.mxu0 0.0
    %644 = vmatpush.msra.mxu0 0.0
    %645 = vmatpush.msra.mxu0 0.0
    %646 = vmatpush.msra.mxu0 0.0
    %647 = vmatpush.msra.mxu0 0.0
    %648 = vmatpush.msra.mxu0 0.0
    %649 = vmatpush.msra.mxu0 0.0
    %650 = vmatpush.msra.mxu0 0.0
    %651 = vmatpush.msra.mxu0 0.0
    %652 = vmatpush.msra.mxu0 0.0
    %653 = vmatpush.msra.mxu0 0.0
    %654 = vmatpush.msra.mxu0 0.0
    %655 = vmatpush.msra.mxu0 0.0
    %656 = vmatpush.msra.mxu0 %v404
    %657 = vmatmul.f32.gmra.mxu0 %v391
    %v658 = vpop.f32.mrf.mxu0
    %v659 = vadd.f32 %v639, %v658
    %660 = vdwg.mxu0
    %661 = vmatpush.msra.mxu0 %v203
    %662 = vmatpush.msra.mxu0 %v194
    %663 = vmatpush.msra.mxu0 %v185
    %664 = vmatpush.msra.mxu0 %v176
    %665 = vmatpush.msra.mxu0 %v167
    %666 = vmatpush.msra.mxu0 %v158
    %667 = vmatpush.msra.mxu0 %v149
    %668 = vmatpush.msra.mxu0 %v140
    %669 = vmatpush.msra.mxu0 %v131
    %670 = vmatpush.msra.mxu0 %v122
    %671 = vmatpush.msra.mxu0 %v113
    %672 = vmatpush.msra.mxu0 %v104
    %673 = vmatpush.msra.mxu0 %v95
    %674 = vmatpush.msra.mxu0 %v86
    %675 = vmatpush.msra.mxu0 %v77
    %676 = vmatpush.msra.mxu0 %v68
    %677 = vmatmul.f32.gmra.mxu0 %v385
    %v678 = vpop.f32.mrf.mxu0
    %v679 = vadd.f32 %v369, %v678
    %680 = vdwg.mxu0
    %681 = vmatpush.msra.mxu0 %v347
    %682 = vmatpush.msra.mxu0 %v338
    %683 = vmatpush.msra.mxu0 %v329
    %684 = vmatpush.msra.mxu0 %v320
    %685 = vmatpush.msra.mxu0 %v311
    %686 = vmatpush.msra.mxu0 %v302
    %687 = vmatpush.msra.mxu0 %v293
    %688 = vmatpush.msra.mxu0 %v284
    %689 = vmatpush.msra.mxu0 %v275
    %690 = vmatpush.msra.mxu0 %v266
    %691 = vmatpush.msra.mxu0 %v257
    %692 = vmatpush.msra.mxu0 %v248
    %693 = vmatpush.msra.mxu0 %v239
    %694 = vmatpush.msra.mxu0 %v230
    %695 = vmatpush.msra.mxu0 %v221
    %696 = vmatpush.msra.mxu0 %v212
    %697 = vmatmul.f32.gmra.mxu0 %v386
    %v698 = vpop.f32.mrf.mxu0
    %v699 = vadd.f32 %v679, %v698
    %700 = vdwg.mxu0
    %701 = vmatpush.msra.mxu0 0.0
    %702 = vmatpush.msra.mxu0 0.0
    %703 = vmatpush.msra.mxu0 0.0
    %704 = vmatpush.msra.mxu0 0.0
    %705 = vmatpush.msra.mxu0 0.0
    %706 = vmatpush.msra.mxu0 0.0
    %707 = vmatpush.msra.mxu0 0.0
    %708 = vmatpush.msra.mxu0 0.0
    %709 = vmatpush.msra.mxu0 0.0
    %710 = vmatpush.msra.mxu0 0.0
    %711 = vmatpush.msra.mxu0 0.0
    %712 = vmatpush.msra.mxu0 0.0
    %713 = vmatpush.msra.mxu0 0.0
    %714 = vmatpush.msra.mxu0 0.0
    %715 = vmatpush.msra.mxu0 0.0
    %716 = vmatpush.msra.mxu0 %v407
    %717 = vmatmul.f32.gmra.mxu0 %v391
    %v718 = vpop.f32.mrf.mxu0
    %v719 = vadd.f32 %v699, %v718
    %720 = vdwg.mxu0
    %721 = vmatpush.msra.mxu0 %v204
    %722 = vmatpush.msra.mxu0 %v195
    %723 = vmatpush.msra.mxu0 %v186
    %724 = vmatpush.msra.mxu0 %v177
    %725 = vmatpush.msra.mxu0 %v168
    %726 = vmatpush.msra.mxu0 %v159
    %727 = vmatpush.msra.mxu0 %v150
    %728 = vmatpush.msra.mxu0 %v141
    %729 = vmatpush.msra.mxu0 %v132
    %730 = vmatpush.msra.mxu0 %v123
    %731 = vmatpush.msra.mxu0 %v114
    %732 = vmatpush.msra.mxu0 %v105
    %733 = vmatpush.msra.mxu0 %v96
    %734 = vmatpush.msra.mxu0 %v87
    %735 = vmatpush.msra.mxu0 %v78
    %736 = vmatpush.msra.mxu0 %v69
    %737 = vmatmul.f32.gmra.mxu0 %v385
    %v738 = vpop.f32.mrf.mxu0
    %v739 = vadd.f32 %v370, %v738
    %740 = vdwg.mxu0
    %741 = vmatpush.msra.mxu0 %v348
    %742 = vmatpush.msra.mxu0 %v339
    %743 = vmatpush.msra.mxu0 %v330
    %744 = vmatpush.msra.mxu0 %v321
    %745 = vmatpush.msra.mxu0 %v312
    %746 = vmatpush.msra.mxu0 %v303
    %747 = vmatpush.msra.mxu0 %v294
    %748 = vmatpush.msra.mxu0 %v285
    %749 = vmatpush.msra.mxu0 %v276
    %750 = vmatpush.msra.mxu0 %v267
    %751 = vmatpush.msra.mxu0 %v258
    %752 = vmatpush.msra.mxu0 %v249
    %753 = vmatpush.msra.mxu0 %v240
    %754 = vmatpush.msra.mxu0 %v231
    %755 = vmatpush.msra.mxu0 %v222
    %756 = vmatpush.msra.mxu0 %v213
    %757 = vmatmul.f32.gmra.mxu0 %v386
    %v758 = vpop.f32.mrf.mxu0
    %v759 = vadd.f32 %v739, %v758
    %760 = vdwg.mxu0
    %761 = vmatpush.msra.mxu0 0.0
    %762 = vmatpush.msra.mxu0 0.0
    %763 = vmatpush.msra.mxu0 0.0
    %764 = vmatpush.msra.mxu0 0.0
    %765 = vmatpush.msra.mxu0 0.0
    %766 = vmatpush.msra.mxu0 0.0
    %767 = vmatpush.msra.mxu0 0.0
    %768 = vmatpush.msra.mxu0 0.0
    %769 = vmatpush.msra.mxu0 0.0
    %770 = vmatpush.msra.mxu0 0.0
    %771 = vmatpush.msra.mxu0 0.0
    %772 = vmatpush.msra.mxu0 0.0
    %773 = vmatpush.msra.mxu0 0.0
    %774 = vmatpush.msra.mxu0 0.0
    %775 = vmatpush.msra.mxu0 0.0
    %776 = vmatpush.msra.mxu0 %v410
    %777 = vmatmul.f32.gmra.mxu0 %v391
    %v778 = vpop.f32.mrf.mxu0
    %v779 = vadd.f32 %v759, %v778
    %780 = vdwg.mxu0
    %781 = vmatpush.msra.mxu0 %v205
    %782 = vmatpush.msra.mxu0 %v196
    %783 = vmatpush.msra.mxu0 %v187
    %784 = vmatpush.msra.mxu0 %v178
    %785 = vmatpush.msra.mxu0 %v169
    %786 = vmatpush.msra.mxu0 %v160
    %787 = vmatpush.msra.mxu0 %v151
    %788 = vmatpush.msra.mxu0 %v142
    %789 = vmatpush.msra.mxu0 %v133
    %790 = vmatpush.msra.mxu0 %v124
    %791 = vmatpush.msra.mxu0 %v115
    %792 = vmatpush.msra.mxu0 %v106
    %793 = vmatpush.msra.mxu0 %v97
    %794 = vmatpush.msra.mxu0 %v88
    %795 = vmatpush.msra.mxu0 %v79
    %796 = vmatpush.msra.mxu0 %v70
    %797 = vmatmul.f32.gmra.mxu0 %v385
    %v798 = vpop.f32.mrf.mxu0
    %v799 = vadd.f32 %v371, %v798
    %800 = vdwg.mxu0
    %801 = vmatpush.msra.mxu0 %v349
    %802 = vmatpush.msra.mxu0 %v340
    %803 = vmatpush.msra.mxu0 %v331
    %804 = vmatpush.msra.mxu0 %v322
    %805 = vmatpush.msra.mxu0 %v313
    %806 = vmatpush.msra.mxu0 %v304
    %807 = vmatpush.msra.mxu0 %v295
    %808 = vmatpush.msra.mxu0 %v286
    %809 = vmatpush.msra.mxu0 %v277
    %810 = vmatpush.msra.mxu0 %v268
    %811 = vmatpush.msra.mxu0 %v259
    %812 = vmatpush.msra.mxu0 %v250
    %813 = vmatpush.msra.mxu0 %v241
    %814 = vmatpush.msra.mxu0 %v232
    %815 = vmatpush.msra.mxu0 %v223
    %816 = vmatpush.msra.mxu0 %v214
    %817 = vmatmul.f32.gmra.mxu0 %v386
    %v818 = vpop.f32.mrf.mxu0
    %v819 = vadd.f32 %v799, %v818
    %820 = vdwg.mxu0
    %821 = vmatpush.msra.mxu0 0.0
    %822 = vmatpush.msra.mxu0 0.0
    %823 = vmatpush.msra.mxu0 0.0
    %824 = vmatpush.msra.mxu0 0.0
    %825 = vmatpush.msra.mxu0 0.0
    %826 = vmatpush.msra.mxu0 0.0
    %827 = vmatpush.msra.mxu0 0.0
    %828 = vmatpush.msra.mxu0 0.0
    %829 = vmatpush.msra.mxu0 0.0
    %830 = vmatpush.msra.mxu0 0.0
    %831 = vmatpush.msra.mxu0 0.0
    %832 = vmatpush.msra.mxu0 0.0
    %833 = vmatpush.msra.mxu0 0.0
    %834 = vmatpush.msra.mxu0 0.0
    %835 = vmatpush.msra.mxu0 0.0
    %836 = vmatpush.msra.mxu0 %v413
    %837 = vmatmul.f32.gmra.mxu0 %v391
    %v838 = vpop.f32.mrf.mxu0
    %v839 = vadd.f32 %v819, %v838
    %840 = vdwg.mxu0
    %841 = vmatpush.msra.mxu0 %v206
    %842 = vmatpush.msra.mxu0 %v197
    %843 = vmatpush.msra.mxu0 %v188
    %844 = vmatpush.msra.mxu0 %v179
    %845 = vmatpush.msra.mxu0 %v170
    %846 = vmatpush.msra.mxu0 %v161
    %847 = vmatpush.msra.mxu0 %v152
    %848 = vmatpush.msra.mxu0 %v143
    %849 = vmatpush.msra.mxu0 %v134
    %850 = vmatpush.msra.mxu0 %v125
    %851 = vmatpush.msra.mxu0 %v116
    %852 = vmatpush.msra.mxu0 %v107
    %853 = vmatpush.msra.mxu0 %v98
    %854 = vmatpush.msra.mxu0 %v89
    %855 = vmatpush.msra.mxu0 %v80
    %856 = vmatpush.msra.mxu0 %v71
    %857 = vmatmul.f32.gmra.mxu0 %v385
    %v858 = vpop.f32.mrf.mxu0
    %v859 = vadd.f32 %v372, %v858
    %860 = vdwg.mxu0
    %861 = vmatpush.msra.mxu0 %v350
    %862 = vmatpush.msra.mxu0 %v341
    %863 = vmatpush.msra.mxu0 %v332
    %864 = vmatpush.msra.mxu0 %v323
    %865 = vmatpush.msra.mxu0 %v314
    %866 = vmatpush.msra.mxu0 %v305
    %867 = vmatpush.msra.mxu0 %v296
    %868 = vmatpush.msra.mxu0 %v287
    %869 = vmatpush.msra.mxu0 %v278
    %870 = vmatpush.msra.mxu0 %v269
    %871 = vmatpush.msra.mxu0 %v260
    %872 = vmatpush.msra.mxu0 %v251
    %873 = vmatpush.msra.mxu0 %v242
    %874 = vmatpush.msra.mxu0 %v233
    %875 = vmatpush.msra.mxu0 %v224
    %876 = vmatpush.msra.mxu0 %v215
    %877 = vmatmul.f32.gmra.mxu0 %v386
    %v878 = vpop.f32.mrf.mxu0
    %v879 = vadd.f32 %v859, %v878
    %880 = vdwg.mxu0
    %881 = vmatpush.msra.mxu0 0.0
    %882 = vmatpush.msra.mxu0 0.0
    %883 = vmatpush.msra.mxu0 0.0
    %884 = vmatpush.msra.mxu0 0.0
    %885 = vmatpush.msra.mxu0 0.0
    %886 = vmatpush.msra.mxu0 0.0
    %887 = vmatpush.msra.mxu0 0.0
    %888 = vmatpush.msra.mxu0 0.0
    %889 = vmatpush.msra.mxu0 0.0
    %890 = vmatpush.msra.mxu0 0.0
    %891 = vmatpush.msra.mxu0 0.0
    %892 = vmatpush.msra.mxu0 0.0
    %893 = vmatpush.msra.mxu0 0.0
    %894 = vmatpush.msra.mxu0 0.0
    %895 = vmatpush.msra.mxu0 0.0
    %896 = vmatpush.msra.mxu0 %v416
    %897 = vmatmul.f32.gmra.mxu0 %v391
    %v898 = vpop.f32.mrf.mxu0
    %v899 = vadd.f32 %v879, %v898
    %900 = vdwg.mxu0
    %901 = vmatpush.msra.mxu0 %v207
    %902 = vmatpush.msra.mxu0 %v198
    %903 = vmatpush.msra.mxu0 %v189
    %904 = vmatpush.msra.mxu0 %v180
    %905 = vmatpush.msra.mxu0 %v171
    %906 = vmatpush.msra.mxu0 %v162
    %907 = vmatpush.msra.mxu0 %v153
    %908 = vmatpush.msra.mxu0 %v144
    %909 = vmatpush.msra.mxu0 %v135
    %910 = vmatpush.msra.mxu0 %v126
    %911 = vmatpush.msra.mxu0 %v117
    %912 = vmatpush.msra.mxu0 %v108
    %913 = vmatpush.msra.mxu0 %v99
    %914 = vmatpush.msra.mxu0 %v90
    %915 = vmatpush.msra.mxu0 %v81
    %916 = vmatpush.msra.mxu0 %v72
    %917 = vmatmul.f32.gmra.mxu0 %v385
    %v918 = vpop.f32.mrf.mxu0
    %v919 = vadd.f32 %v373, %v918
    %920 = vdwg.mxu0
    %921 = vmatpush.msra.mxu0 %v351
    %922 = vmatpush.msra.mxu0 %v342
    %923 = vmatpush.msra.mxu0 %v333
    %924 = vmatpush.msra.mxu0 %v324
    %925 = vmatpush.msra.mxu0 %v315
    %926 = vmatpush.msra.mxu0 %v306
    %927 = vmatpush.msra.mxu0 %v297
    %928 = vmatpush.msra.mxu0 %v288
    %929 = vmatpush.msra.mxu0 %v279
    %930 = vmatpush.msra.mxu0 %v270
    %931 = vmatpush.msra.mxu0 %v261
    %932 = vmatpush.msra.mxu0 %v252
    %933 = vmatpush.msra.mxu0 %v243
    %934 = vmatpush.msra.mxu0 %v234
    %935 = vmatpush.msra.mxu0 %v225
    %936 = vmatpush.msra.mxu0 %v216
    %937 = vmatmul.f32.gmra.mxu0 %v386
    %v938 = vpop.f32.mrf.mxu0
    %v939 = vadd.f32 %v919, %v938
    %940 = vdwg.mxu0
    %941 = vmatpush.msra.mxu0 0.0
    %942 = vmatpush.msra.mxu0 0.0
    %943 = vmatpush.msra.mxu0 0.0
    %944 = vmatpush.msra.mxu0 0.0
    %945 = vmatpush.msra.mxu0 0.0
    %946 = vmatpush.msra.mxu0 0.0
    %947 = vmatpush.msra.mxu0 0.0
    %948 = vmatpush.msra.mxu0 0.0
    %949 = vmatpush.msra.mxu0 0.0
    %950 = vmatpush.msra.mxu0 0.0
    %951 = vmatpush.msra.mxu0 0.0
    %952 = vmatpush.msra.mxu0 0.0
    %953 = vmatpush.msra.mxu0 0.0
    %954 = vmatpush.msra.mxu0 0.0
    %955 = vmatpush.msra.mxu0 0.0
    %956 = vmatpush.msra.mxu0 %v419
    %957 = vmatmul.f32.gmra.mxu0 %v391
    %v958 = vpop.f32.mrf.mxu0
    %v959 = vadd.f32 %v939, %v958
    %960 = vdwg.mxu0
    %vm961 = vcmp.ge.f32.partialorder %v479, 0.0
    %vm962 = vcmp.ge.f32.partialorder %v539, 0.0
    %vm963 = vcmp.ge.f32.partialorder %v599, 0.0
    %vm964 = vcmp.ge.f32.partialorder %v659, 0.0
    %vm965 = vcmp.ge.f32.partialorder %v719, 0.0
    %vm966 = vcmp.ge.f32.partialorder %v779, 0.0
    %vm967 = vcmp.ge.f32.partialorder %v839, 0.0
    %vm968 = vcmp.ge.f32.partialorder %v899, 0.0
    %vm969 = vcmp.ge.f32.partialorder %v959, 0.0
    %v970 = vstv %s62
    %v971 = vmul.f32 %v970, %v479
    %v972 = vmul.f32 %v970, %v539
    %v973 = vmul.f32 %v970, %v599
    %v974 = vmul.f32 %v970, %v659
    %v975 = vmul.f32 %v970, %v719
    %v976 = vmul.f32 %v970, %v779
    %v977 = vmul.f32 %v970, %v839
    %v978 = vmul.f32 %v970, %v899
    %v979 = vmul.f32 %v970, %v959
    %v980 = vsel %vm961, %v479, %v971
    %v981 = vsel %vm962, %v539, %v972
    %v982 = vsel %vm963, %v599, %v973
    %v983 = vsel %vm964, %v659, %v974
    %v984 = vsel %vm965, %v719, %v975
    %v985 = vsel %vm966, %v779, %v976
    %v986 = vsel %vm967, %v839, %v977
    %v987 = vsel %vm968, %v899, %v978
    %v988 = vsel %vm969, %v959, %v979
    %v997 = vrot.slane %v981, 6
    %v998 = vrot.slane %v982, 4
    %v999 = vrot.slane %v983, 2
    %v1000 = vrot.slane %v985, 6
    %v1001 = vrot.slane %v986, 4
    %v1002 = vrot.slane %v987, 2
    %vm1003 = vcmask 1041408
    %v1004 = vsel %vm1003, %v980, %v997
    %vm1005 = vcmask 1045508
    %v1006 = vsel %vm1005, %v998, %v999
    %vm1007 = vcmask 1043456
    %v1008 = vsel %vm1007, %v1004, %v1006
    %v1009 = vsel %vm1003, %v984, %v1000
    %v1010 = vsel %vm1005, %v1001, %v1002
    %v1011 = vsel %vm1007, %v1009, %v1010
    %1014 = vst [vmem:[#allocation9] sm:$0xff] %v1008
    %1015 = vst [vmem:[#allocation9 + $0x8] sm:$0xff] %v1011
    %1016 = vst [vmem:[#allocation9 + $0x10] sm:$0x3] %v988
    // Predicated region
    $region30: #{tpu_custom_call.1} parent=1 // pred_check
      _
    $region31: #{tpu_custom_call.1} parent=1 // pred_check_branch
      %1018 = sbr.rel (0) target = $region33
    $region32: #{tpu_custom_call.1} parent=1 // pred_region
      %1020 = vsyncadd [#allocation5], 0
      %s1022 = sshll.u32 [#allocation9], 4
      %s1023 = int_to_ptr.vmem [resolvable:$true] %s1022
      %s1024 = sshll.u32 %s4, 4
      %s1025 = int_to_ptr.hbm [resolvable:$true] %s1024
      %1027 = dma.vmem_to_hbm [thread:$0]  %s1023, 288, %s1025, [#allocation5]
    $region33: #{tpu_custom_call.1} parent=1 // pred_fallthru
      _
    // Predicated region
    $region34: #{tpu_custom_call.1} parent=1 // pred_check
      _
    $region35: #{tpu_custom_call.1} parent=1 // pred_check_branch
      %1029 = sbr.rel (0) target = $region37
    $region36: #{tpu_custom_call.1} parent=1 // pred_region
      %1031 = dma.done [#allocation5], 288
    $region37: #{tpu_custom_call.1} parent=1 // pred_fallthru
      _
    %1032 = vsyncpa [#allocation4], 1
    %1033 = vsyncpa [#allocation7], 1
    %1034 = vsyncpa [#allocation5], 1

</llo_original>
